<compile_context>
chip_gen: v7x
topology: tpu7x:2x2x1
jax: 0.10.0
libtpu: 0.0.40
codegen_flags: <defaults>
</compile_context>

<pallas_src>
import functools

import jax
import jax.numpy as jnp
from jax.experimental import pallas as pl
from jax.experimental.pallas import tpu as pltpu

KERNEL_SIZE = 3
BN_EPS = 1e-5
LANE = 128
VMEM_LIMIT = 48 * 1024 * 1024     # leave headroom on v7x (64 MiB physical VMEM)
TARGET_TILE_ROWS = 2048           # target matmul rows (TB * H) per grid step


def _round_up(x, m):
    return ((x + m - 1) // m) * m


def _conv_taps(x_ref, b_ref, *, h, k):
    """Shared conv body: K shifted matmuls (tap accumulation), f32 acc.

    x_ref : (TB, Hp, WCin_p) bf16 reflection-padded activations, W folded
            into the lane dim (lane = w' * Cin + ci).
    b_ref : (K, WCin_p, WCout_p) bf16 banded row-conv weights (resident).
    returns (TB*H, WCout_p) f32 conv output rows for this tile.
    """
    tb, _, wcin_p = x_ref.shape
    wcout_p = b_ref.shape[-1]
    rows = tb * h

    xb = x_ref[...]                                   # single VMEM block load
    lhs0 = xb[:, 0:h, :].reshape(rows, wcin_p)
    acc = jnp.dot(lhs0, b_ref[0], preferred_element_type=jnp.float32)
    for kh in range(1, k):                            # static unroll: K-1 more taps
        lhs = xb[:, kh:kh + h, :].reshape(rows, wcin_p)
        acc = acc + jnp.dot(lhs, b_ref[kh], preferred_element_type=jnp.float32)
    return acc


def _stats_kernel(x_ref, b_ref, stat_ref, *, h, k):
    """Pass 1: per-tile partial sum / sum-of-squares of the conv output.

    stat_ref : (1, 2, WCout_p) f32 -- [partial sum; partial sum of squares]
    (conv output itself is NOT written; it is recomputed in pass 2).
    """
    acc = _conv_taps(x_ref, b_ref, h=h, k=k)
    stat_ref[0, 0:1, :] = jnp.sum(acc, axis=0, keepdims=True)
    stat_ref[0, 1:2, :] = jnp.sum(acc * acc, axis=0, keepdims=True)


def _conv_bn_relu_kernel(x_ref, b_ref, ss_ref, o_ref, *, h, k):
    """Pass 2: recompute the conv tile and fuse y = relu(conv*scale + shift).

    ss_ref : (2, WCout_p) f32 folded per-lane [scale; shift] (resident).
    o_ref  : (TB*H, WCout_p) f32, lane-dense single final store.
    """
    acc = _conv_taps(x_ref, b_ref, h=h, k=k)
    # TODO(synk): emit bf16 here if the downstream consumer allows it.
    o_ref[...] = jnp.maximum(acc * ss_ref[0:1, :] + ss_ref[1:2, :], 0.0)


def conv2d_same(x_nchw, weight, bias, gamma, beta,
                kernel_size=KERNEL_SIZE, block_batch=None):
    """x_nchw: (N, Cin, H, W) f32. weight: (Cout, Cin, K, K) (PyTorch OIHW)."""
    ka = kernel_size // 2
    kb = ka - 1 if kernel_size % 2 == 0 else ka
    k = kernel_size

    n, cin, h, w = x_nchw.shape
    cout = weight.shape[0]
    hp = h + ka + kb
    wp = w + ka + kb

    # The conv bias is exactly cancelled by training-mode BN mean subtraction.
    del bias

    # Folded-lane sizes: contraction lanes = Wp*Cin, output lanes = W*Cout.
    wcin = wp * cin
    wcout = w * cout
    wcin_p = _round_up(wcin, LANE)
    wcout_p = _round_up(wcout, LANE)

    # --- batch-tile size ------------------------------------------------------
    if block_batch is None:
        block_batch = max(1, TARGET_TILE_ROWS // max(h, 1))
    tb = max(1, min(n, block_batch))
    # Output tile rows (tb*H) must be sublane-aligned unless there is a single
    # tile (then the block equals the full array extent).
    while tb < n and (tb * h) % 8 != 0:
        tb += 1
    if (tb * h) % 8 != 0:
        tb = n
    n_p = _round_up(n, tb)
    n_tiles = n_p // tb

    # --- glue (plain JAX): NHWC + bf16 cast fused into the reflect pad --------
    x = jnp.transpose(x_nchw, (0, 2, 3, 1)).astype(jnp.bfloat16)          # NHWC bf16
    xpad = jnp.pad(x, ((0, 0), (ka, kb), (ka, kb), (0, 0)), mode="reflect")
    xpad = xpad.reshape(n, hp, wcin)                                       # fold W into lanes
    xpad = jnp.pad(xpad, ((0, n_p - n), (0, 0), (0, wcin_p - wcin)))       # zero pad
    # TODO(synk): return NHWC (drop the final transpose) if the consumer
    # accepts it; the NCHW<->NHWC round trip is ~2 extra passes over the tensor.

    # --- banded row-conv weight matrices  B[kh] : (Wp*Cin, W*Cout) -------------
    # B[kh, wp*Cin + ci, w*Cout + co] = weight[co, ci, kh, wp - w] for 0<=wp-w<K.
    # Conv2d is cross-correlation: no kernel flip.
    wk = jnp.transpose(weight, (2, 3, 1, 0)).astype(jnp.float32)   # (kh, kw, ci, co)
    shift = jnp.stack([jnp.eye(wp, w, k=-kw, dtype=jnp.float32) for kw in range(k)])
    bmat = jnp.einsum("kpw,hkio->hpiwo", shift, wk).reshape(k, wcin, wcout)
    bmat = jnp.pad(bmat, ((0, 0), (0, wcin_p - wcin), (0, wcout_p - wcout)))
    bmat = bmat.astype(jnp.bfloat16)

    x_spec = pl.BlockSpec((tb, hp, wcin_p), lambda i: (i, 0, 0))
    b_spec = pl.BlockSpec((k, wcin_p, wcout_p), lambda i: (0, 0, 0))       # resident

    # --- pass 1: per-tile partial batch statistics (no conv intermediate) -----
    stats = pl.pallas_call(
        functools.partial(_stats_kernel, h=h, k=k),
        out_shape=jax.ShapeDtypeStruct((n_tiles, 2, wcout_p), jnp.float32),
        grid_spec=pltpu.PrefetchScalarGridSpec(
            num_scalar_prefetch=0,
            grid=(n_tiles,),
            in_specs=[x_spec, b_spec],
            out_specs=pl.BlockSpec((1, 2, wcout_p), lambda i: (i, 0, 0)),
        ),
        compiler_params=pltpu.CompilerParams(
            dimension_semantics=("parallel",),        # per-tile partials => no serial acc
            vmem_limit_bytes=VMEM_LIMIT,
        ),
    )(xpad, bmat)

    # --- BN finalize (tiny, plain JAX): combine tile partials, fold gamma/beta -
    count = float(n * h * w)                          # true (unpadded) row count
    sums = jnp.sum(stats[:, 0, :wcout].reshape(n_tiles, w, cout), axis=(0, 1))
    ssqs = jnp.sum(stats[:, 1, :wcout].reshape(n_tiles, w, cout), axis=(0, 1))
    mean = sums / count
    var = jnp.maximum(ssqs / count - mean * mean, 0.0)           # biased (training BN)
    # TODO(synk): switch to shifted/Welford statistics for very large N*H*W
    # where E[x^2]-E[x]^2 cancellation could exceed the bf16-matmul tolerance.
    scale_c = gamma.astype(jnp.float32) * jax.lax.rsqrt(var + BN_EPS)
    shift_c = beta.astype(jnp.float32) - mean * scale_c
    ss = jnp.stack([jnp.tile(scale_c, w), jnp.tile(shift_c, w)], axis=0)   # folded lanes
    ss = jnp.pad(ss, ((0, 0), (0, wcout_p - wcout)))

    # --- pass 2: conv recompute + scale/shift + ReLU, single lane-dense store --
    out_flat = pl.pallas_call(
        functools.partial(_conv_bn_relu_kernel, h=h, k=k),
        out_shape=jax.ShapeDtypeStruct((n_p * h, wcout_p), jnp.float32),
        grid_spec=pltpu.PrefetchScalarGridSpec(
            num_scalar_prefetch=0,
            grid=(n_tiles,),
            in_specs=[x_spec, b_spec,
                      pl.BlockSpec((2, wcout_p), lambda i: (0, 0))],       # resident
            out_specs=pl.BlockSpec((tb * h, wcout_p), lambda i: (i, 0)),
        ),
        compiler_params=pltpu.CompilerParams(
            dimension_semantics=("parallel",),
            vmem_limit_bytes=VMEM_LIMIT,
        ),
    )(xpad, bmat, ss)

    # strip lane/batch padding, unfold W, back to NCHW
    out = out_flat[:n * h, :wcout].reshape(n, h, w, cout)
    return jnp.transpose(out, (0, 3, 1, 2))


def reference(x_nchw, weight, bias, gamma, beta, kernel_size=KERNEL_SIZE):
    """Pure-JAX f32 reference mirroring the PyTorch forward (training-mode BN)."""
    ka = kernel_size // 2
    kb = ka - 1 if kernel_size % 2 == 0 else ka
    xp = jnp.pad(x_nchw, ((0, 0), (0, 0), (ka, kb), (ka, kb)), mode="reflect")
    y = jax.lax.conv_general_dilated(
        xp, weight, window_strides=(1, 1), padding="VALID",
        dimension_numbers=("NCHW", "OIHW", "NCHW"))
    y = y + bias.reshape(1, -1, 1, 1)
    mean = jnp.mean(y, axis=(0, 2, 3), keepdims=True)
    var = jnp.mean((y - mean) ** 2, axis=(0, 2, 3), keepdims=True)
    y = (y - mean) * jax.lax.rsqrt(var + BN_EPS)
    y = y * gamma.reshape(1, -1, 1, 1) + beta.reshape(1, -1, 1, 1)
    return jnp.maximum(y, 0.0)


if __name__ == "__main__":
    key = jax.random.PRNGKey(0)
    kx, kwt, kbs = jax.random.split(key, 3)

    N, Cin, H, W = 2, 4, 16, 16
    Cout, K = 8, KERNEL_SIZE

    x = jax.random.normal(kx, (N, Cin, H, W), jnp.float32)

    # Deterministic parameter init (matches Conv2d default init distribution).
    fan_in = Cin * K * K
    bound = 1.0 / (fan_in ** 0.5)
    weight = jax.random.uniform(kwt, (Cout, Cin, K, K), jnp.float32, -bound, bound)
    bias = jax.random.uniform(kbs, (Cout,), jnp.float32, -bound, bound)
    gamma = jnp.ones((Cout,), jnp.float32)    # BatchNorm2d weight init
    beta = jnp.zeros((Cout,), jnp.float32)    # BatchNorm2d bias init

    ref = reference(x, weight, bias, gamma, beta)

    # Default tiling (single batch tile at this toy shape).
    out = conv2d_same(x, weight, bias, gamma, beta)
    jax.block_until_ready(out)
    assert out.shape == (N, Cout, H, W), out.shape
    max_err = float(jnp.max(jnp.abs(out - ref)))
    # bf16 matmul inputs (f32 accumulation / f32 BN) vs. f32 reference.
    assert jnp.allclose(out, ref, atol=2e-2, rtol=2e-2), max_err

    # Multi-tile path: exercises per-tile partial-stat combination.
    out2 = conv2d_same(x, weight, bias, gamma, beta, block_batch=1)
    jax.block_until_ready(out2)
    max_err2 = float(jnp.max(jnp.abs(out2 - ref)))
    assert jnp.allclose(out2, ref, atol=2e-2, rtol=2e-2), max_err2

    print("KERNEL_OK")
</pallas_src>

<mosaic_0001>
module attributes {stable_mosaic.version = 11 : i64} {
  func.func @_stats_kernel(%arg0: i32, %arg1: memref<2x18x128xbf16, #tpu.memory_space<vmem>>, %arg2: memref<3x128x128xbf16, #tpu.memory_space<vmem>>, %arg3: memref<1x2x128xf32, #tpu.memory_space<vmem>>) attributes {dimension_semantics = [#tpu.dimension_semantics<parallel>], iteration_bounds = array<i64: 1>, scalar_prefetch = 0 : i64, scratch_operands = 0 : i64, tpu.core_type = #tpu.core_type<tc>, window_params = [{transform_indices = @transform_0, window_bounds = array<i64: 2, 18, 128>}, {pipeline_mode = #tpu.pipeline_mode<synchronous>, transform_indices = @transform_1, window_bounds = array<i64: 3, 128, 128>}, {transform_indices = @transform_2, window_bounds = array<i64: 1, 2, 128>}]} {
    %c0 = arith.constant 0 : index
    %c0_0 = arith.constant 0 : index
    %c0_1 = arith.constant 0 : index
    %0 = vector.load %arg1[%c0, %c0_0, %c0_1] : memref<2x18x128xbf16, #tpu.memory_space<vmem>>, vector<2x18x128xbf16>
    %1 = vector.extract_strided_slice %0 {offsets = [0, 0, 0], sizes = [2, 16, 128], strides = [1, 1, 1]} : vector<2x18x128xbf16> to vector<2x16x128xbf16>
    %2 = vector.shape_cast %1 : vector<2x16x128xbf16> to vector<32x128xbf16>
    %c0_2 = arith.constant 0 : index
    %c0_3 = arith.constant 0 : index
    %c0_4 = arith.constant 0 : index
    %3 = vector.load %arg2[%c0_2, %c0_3, %c0_4] : memref<3x128x128xbf16, #tpu.memory_space<vmem>>, vector<1x128x128xbf16>
    %4 = vector.shape_cast %3 : vector<1x128x128xbf16> to vector<128x128xbf16>
    %cst = arith.constant dense<0.000000e+00> : vector<32x128xf32>
    %5 = tpu.matmul %2, %4, %cst {dimension_numbers = #tpu.dot_dimension_numbers<[1], [0], [0], [1], [0, 0, 1, 1], [], []>} : vector<32x128xbf16>, vector<128x128xbf16>, vector<32x128xf32> -> vector<32x128xf32>
    %6 = vector.extract_strided_slice %0 {offsets = [0, 1, 0], sizes = [2, 16, 128], strides = [1, 1, 1]} : vector<2x18x128xbf16> to vector<2x16x128xbf16>
    %7 = vector.shape_cast %6 : vector<2x16x128xbf16> to vector<32x128xbf16>
    %c1 = arith.constant 1 : index
    %c0_5 = arith.constant 0 : index
    %c0_6 = arith.constant 0 : index
    %8 = vector.load %arg2[%c1, %c0_5, %c0_6] : memref<3x128x128xbf16, #tpu.memory_space<vmem>>, vector<1x128x128xbf16>
    %9 = vector.shape_cast %8 : vector<1x128x128xbf16> to vector<128x128xbf16>
    %cst_7 = arith.constant dense<0.000000e+00> : vector<32x128xf32>
    %10 = tpu.matmul %7, %9, %cst_7 {dimension_numbers = #tpu.dot_dimension_numbers<[1], [0], [0], [1], [0, 0, 1, 1], [], []>} : vector<32x128xbf16>, vector<128x128xbf16>, vector<32x128xf32> -> vector<32x128xf32>
    %11 = arith.addf %5, %10 : vector<32x128xf32>
    %12 = vector.extract_strided_slice %0 {offsets = [0, 2, 0], sizes = [2, 16, 128], strides = [1, 1, 1]} : vector<2x18x128xbf16> to vector<2x16x128xbf16>
    %13 = vector.shape_cast %12 : vector<2x16x128xbf16> to vector<32x128xbf16>
    %c2 = arith.constant 2 : index
    %c0_8 = arith.constant 0 : index
    %c0_9 = arith.constant 0 : index
    %14 = vector.load %arg2[%c2, %c0_8, %c0_9] : memref<3x128x128xbf16, #tpu.memory_space<vmem>>, vector<1x128x128xbf16>
    %15 = vector.shape_cast %14 : vector<1x128x128xbf16> to vector<128x128xbf16>
    %cst_10 = arith.constant dense<0.000000e+00> : vector<32x128xf32>
    %16 = tpu.matmul %13, %15, %cst_10 {dimension_numbers = #tpu.dot_dimension_numbers<[1], [0], [0], [1], [0, 0, 1, 1], [], []>} : vector<32x128xbf16>, vector<128x128xbf16>, vector<32x128xf32> -> vector<32x128xf32>
    %17 = arith.addf %11, %16 : vector<32x128xf32>
    %cst_11 = arith.constant dense<0.000000e+00> : vector<128xf32>
    %18 = vector.multi_reduction <add>, %17, %cst_11 [0] : vector<32x128xf32> to vector<128xf32>
    %19 = vector.shape_cast %18 : vector<128xf32> to vector<1x128xf32>
    %c0_12 = arith.constant 0 : index
    %c0_13 = arith.constant 0 : index
    %c0_14 = arith.constant 0 : index
    %20 = vector.load %arg3[%c0_12, %c0_13, %c0_14] : memref<1x2x128xf32, #tpu.memory_space<vmem>>, vector<1x1x128xf32>
    %21 = vector.shape_cast %20 : vector<1x1x128xf32> to vector<1x128xf32>
    %22 = vector.shape_cast %19 : vector<1x128xf32> to vector<1x1x128xf32>
    tpu.vector_store %arg3[%c0_12, %c0_13, %c0_14], %22 {strides = array<i32>} : memref<1x2x128xf32, #tpu.memory_space<vmem>>, vector<1x1x128xf32>,
    %23 = arith.mulf %17, %17 : vector<32x128xf32>
    %cst_15 = arith.constant dense<0.000000e+00> : vector<128xf32>
    %24 = vector.multi_reduction <add>, %23, %cst_15 [0] : vector<32x128xf32> to vector<128xf32>
    %25 = vector.shape_cast %24 : vector<128xf32> to vector<1x128xf32>
    %c0_16 = arith.constant 0 : index
    %c1_17 = arith.constant 1 : index
    %c0_18 = arith.constant 0 : index
    %26 = vector.load %arg3[%c0_16, %c1_17, %c0_18] : memref<1x2x128xf32, #tpu.memory_space<vmem>>, vector<1x1x128xf32>
    %27 = vector.shape_cast %26 : vector<1x1x128xf32> to vector<1x128xf32>
    %28 = vector.shape_cast %25 : vector<1x128xf32> to vector<1x1x128xf32>
    tpu.vector_store %arg3[%c0_16, %c1_17, %c0_18], %28 {strides = array<i32>} : memref<1x2x128xf32, #tpu.memory_space<vmem>>, vector<1x1x128xf32>,
    return
  }
  func.func @transform_0(%arg0: i32) -> (i32, i32, i32) {
    %c0_i32 = arith.constant 0 : i32
    %c0_i32_0 = arith.constant 0 : i32
    %c0_i32_1 = arith.constant 0 : i32
    return %arg0, %c0_i32, %c0_i32_0 : i32, i32, i32
  }
  func.func @transform_1(%arg0: i32) -> (i32, i32, i32) {
    %c0_i32 = arith.constant 0 : i32
    %c0_i32_0 = arith.constant 0 : i32
    %c0_i32_1 = arith.constant 0 : i32
    %c0_i32_2 = arith.constant 0 : i32
    return %c0_i32, %c0_i32_0, %c0_i32_1 : i32, i32, i32
  }
  func.func @transform_2(%arg0: i32) -> (i32, i32, i32) {
    %c0_i32 = arith.constant 0 : i32
    %c0_i32_0 = arith.constant 0 : i32
    %c0_i32_1 = arith.constant 0 : i32
    return %arg0, %c0_i32, %c0_i32_0 : i32, i32, i32
  }
}

</mosaic_0001>

<llo_original>
// kernel: tpu_custom_call.1
$region0: #{tpu_custom_call.1}
  #allocation0 [shape = 'u32[]', space=smem, size = 0x4, offset = 0x4, fixed_abs, tag = 'smem constant byte address 0x4 - core index']
  #allocation1 [shape = 'u32[144,128]{1,0:T(1,128)}', space=vmem, size = 0x12000, scoped, tag = 'internal scratch']
  %s0 = inlined_call_operand.vmem [shape: bf16[2,18,128], index: 0, kind: input, shape index: {}]
  %s1 = inlined_call_operand.hbm [shape: bf16[3,128,128], index: 1, kind: input, shape index: {}]
  %s2 = inlined_call_operand.hbm [shape: f32[1,2,128], index: 2, kind: output, shape index: {}]
  %s3 = sld [smem:[#allocation0]]
  $region22: #{tpu_custom_call.1} parent=0
    _
  %s5 = ssub.s32 1, %s3
  %s6 = scalar_select 0, %s5, %s3
  $region1: #{tpu_custom_call.1} parent=0
    #allocation2 [shape = 'u8[98304]{0}', space=vmem, size = 0x18000, scoped, tag = 'input window, operand 1, single buffered']
    #allocation3 [shape = 's32[1]{0}', space=sflag, size = 0x4, scoped, tag = 'scoped memory for tpu_custom_call.1']
    #allocation4 [shape = 's32[1]{0}', space=sflag, size = 0x4, scoped, tag = 'scoped memory for tpu_custom_call.1']
    #allocation5 [shape = 'u8[1024]{0}', space=vmem, size = 0x400, scoped, tag = 'output window, operand 0, single buffered']
    %7 = vsyncpa [#allocation3], 0
    %8 = vsyncpa [#allocation4], 0
    // Predicated region
    $region2: #{tpu_custom_call.1} parent=1 // pred_check
      _
    $region3: #{tpu_custom_call.1} parent=1 // pred_check_branch
      %10 = sbr.rel (0) target = $region5
    $region4: #{tpu_custom_call.1} parent=1 // pred_region
      _
    $region5: #{tpu_custom_call.1} parent=1 // pred_fallthru
      _
    // Predicated region
    $region6: #{tpu_custom_call.1} parent=1 // pred_check
      _
    $region7: #{tpu_custom_call.1} parent=1 // pred_check_branch
      %12 = sbr.rel (0) target = $region9
    $region8: #{tpu_custom_call.1} parent=1 // pred_region
      %s14 = ssub.s32 3072, 3072
      %15 = vsyncadd [#allocation3], %s14
      %s16 = sshll.u32 [#allocation2], 4
      %s17 = int_to_ptr.vmem [resolvable:$true] %s16
      %22 = dma.hbm_to_vmem [thread:$0]  %s1, 3072, %s17, [#allocation3], 64, 64, 4
    $region9: #{tpu_custom_call.1} parent=1 // pred_fallthru
      _
    // Predicated region
    $region10: #{tpu_custom_call.1} parent=1 // pred_check
      _
    $region11: #{tpu_custom_call.1} parent=1 // pred_check_branch
      %24 = sbr.rel (0) target = $region13
    $region12: #{tpu_custom_call.1} parent=1 // pred_region
      %25 = dma.done [#allocation3], 3072
    $region13: #{tpu_custom_call.1} parent=1 // pred_fallthru
      _
    %v27 = vld [vmem:[%s0] sm:$0xf]
    %v28 = vld [vmem:[%s0 + $0x4] sm:$0xf]
    %v29 = vld [vmem:[%s0 + $0x8] sm:$0x1]
    %v30 = vld [vmem:[%s0 + $0xc] sm:$0xf]
    %v31 = vld [vmem:[%s0 + $0x10] sm:$0xf]
    %v32 = vld [vmem:[%s0 + $0x14] sm:$0x1]
    %v33 = vld [vmem:[#allocation2] sm:$0xf]
    %v34 = vld [vmem:[#allocation2 + $0x4] sm:$0xf]
    %v35 = vld [vmem:[#allocation2 + $0x8] sm:$0xf]
    %v36 = vld [vmem:[#allocation2 + $0xc] sm:$0xf]
    %v37 = vld [vmem:[#allocation2 + $0x10] sm:$0xf]
    %v38 = vld [vmem:[#allocation2 + $0x14] sm:$0xf]
    %v39 = vld [vmem:[#allocation2 + $0x18] sm:$0xf]
    %v40 = vld [vmem:[#allocation2 + $0x1c] sm:$0xf]
    %v41 = vld [vmem:[#allocation2 + $0x20] sm:$0xf]
    %v42 = vld [vmem:[#allocation2 + $0x24] sm:$0xf]
    %v43 = vld [vmem:[#allocation2 + $0x28] sm:$0xf]
    %v44 = vld [vmem:[#allocation2 + $0x2c] sm:$0xf]
    %v45 = vld [vmem:[#allocation2 + $0x30] sm:$0xf]
    %v46 = vld [vmem:[#allocation2 + $0x34] sm:$0xf]
    %v47 = vld [vmem:[#allocation2 + $0x38] sm:$0xf]
    %v48 = vld [vmem:[#allocation2 + $0x3c] sm:$0xf]
    %vm49 = vsmask.f32 3328
    %vm50 = vsmask.f32 7440
    %vm51 = vmor %vm49, %vm50
    %v53 = vshrl.u32 %v27, 16
    %v55 = vrot.slane %v53, 4
    %v56 = vshll.u32 %v27, 16
    %v58 = vrot.slane %v56, 5
    %v59 = vor.u32 %v55, %v58
    %v60 = vrot.slane %v59, 4
    %v62 = vshll.u32 %v28, 16
    %v64 = vrot.slane %v62, 5
    %v65 = vsel %vm51, %v60, %v64
    %v66 = vshrl.u32 %v28, 16
    %v68 = vrot.slane %v66, 4
    %v69 = vor.u32 %v68, %v64
    %v70 = vrot.slane %v69, 4
    %v72 = vshll.u32 %v29, 16
    %v74 = vrot.slane %v72, 5
    %v75 = vsel %vm51, %v70, %v74
    %v77 = vshrl.u32 %v30, 16
    %v79 = vrot.slane %v77, 4
    %v80 = vshll.u32 %v30, 16
    %v82 = vrot.slane %v80, 5
    %v83 = vor.u32 %v79, %v82
    %v84 = vrot.slane %v83, 4
    %v86 = vshll.u32 %v31, 16
    %v88 = vrot.slane %v86, 5
    %v89 = vsel %vm51, %v84, %v88
    %v90 = vshrl.u32 %v31, 16
    %v92 = vrot.slane %v90, 4
    %v93 = vor.u32 %v92, %v88
    %v94 = vrot.slane %v93, 4
    %v96 = vshll.u32 %v32, 16
    %v98 = vrot.slane %v96, 5
    %v99 = vsel %vm51, %v94, %v98
    %s100 = scalar_lea.vmem [#allocation2], 64
    %v101 = vld [vmem:[%s100] sm:$0xf]
    %v102 = vld [vmem:[%s100 + $0x4] sm:$0xf]
    %v103 = vld [vmem:[%s100 + $0x8] sm:$0xf]
    %v104 = vld [vmem:[%s100 + $0xc] sm:$0xf]
    %v105 = vld [vmem:[%s100 + $0x10] sm:$0xf]
    %v106 = vld [vmem:[%s100 + $0x14] sm:$0xf]
    %v107 = vld [vmem:[%s100 + $0x18] sm:$0xf]
    %v108 = vld [vmem:[%s100 + $0x1c] sm:$0xf]
    %v109 = vld [vmem:[%s100 + $0x20] sm:$0xf]
    %v110 = vld [vmem:[%s100 + $0x24] sm:$0xf]
    %v111 = vld [vmem:[%s100 + $0x28] sm:$0xf]
    %v112 = vld [vmem:[%s100 + $0x2c] sm:$0xf]
    %v113 = vld [vmem:[%s100 + $0x30] sm:$0xf]
    %v114 = vld [vmem:[%s100 + $0x34] sm:$0xf]
    %v115 = vld [vmem:[%s100 + $0x38] sm:$0xf]
    %v116 = vld [vmem:[%s100 + $0x3c] sm:$0xf]
    %v117 = vunpack.c.l.b16 %v65
    %v118 = vunpack.c.l.b16 %v75
    %v119 = vunpack.c.l.b16 %v89
    %v120 = vunpack.c.l.b16 %v99
    %v121 = vpack.c.b16 %v118, %v117
    %v122 = vpack.c.b16 %v120, %v119
    %v141 = vunpack.c.l.b16 %v101
    %v142 = vunpack.c.l.b16 %v102
    %v143 = vunpack.c.l.b16 %v103
    %v144 = vunpack.c.l.b16 %v104
    %v145 = vunpack.c.l.b16 %v105
    %v146 = vunpack.c.l.b16 %v106
    %v147 = vunpack.c.l.b16 %v107
    %v148 = vunpack.c.l.b16 %v108
    %v149 = vunpack.c.l.b16 %v109
    %v150 = vunpack.c.l.b16 %v110
    %v151 = vunpack.c.l.b16 %v111
    %v152 = vunpack.c.l.b16 %v112
    %v153 = vunpack.c.l.b16 %v113
    %v154 = vunpack.c.l.b16 %v114
    %v155 = vunpack.c.l.b16 %v115
    %v156 = vunpack.c.l.b16 %v116
    %v157 = vpack.c.b16 %v142, %v141
    %v158 = vpack.c.b16 %v144, %v143
    %v159 = vpack.c.b16 %v146, %v145
    %v160 = vpack.c.b16 %v148, %v147
    %v161 = vpack.c.b16 %v150, %v149
    %v162 = vpack.c.b16 %v152, %v151
    %v163 = vpack.c.b16 %v154, %v153
    %v164 = vpack.c.b16 %v156, %v155
    %173 = vmatprep.subr.bf16.mxu0 0
    %174 = vmatpush1.bf16.msra.mxu0 %v157
    %175 = vmatprep.subr.bf16.mxu0 0
    %176 = vmatpush1.bf16.msra.mxu0 %v158
    %177 = vmatprep.subr.bf16.mxu0 0
    %178 = vmatpush1.bf16.msra.mxu0 %v159
    %179 = vmatprep.subr.bf16.mxu0 0
    %180 = vmatpush1.bf16.msra.mxu0 %v160
    %181 = vmatprep.subr.bf16.mxu0 0
    %182 = vmatpush1.bf16.msra.mxu0 %v161
    %183 = vmatprep.subr.bf16.mxu0 0
    %184 = vmatpush1.bf16.msra.mxu0 %v162
    %185 = vmatprep.subr.bf16.mxu0 0
    %186 = vmatpush1.bf16.msra.mxu0 %v163
    %187 = vmatprep.subr.bf16.mxu0 0
    %188 = vmatpush1.bf16.msra.mxu0 %v164
    %189 = vmatprep.subr.bf16.mxu0 0
    %190 = vmatpush1.bf16.msra.mxu0 0
    %191 = vmatprep.subr.bf16.mxu0 0
    %192 = vmatpush1.bf16.msra.mxu0 0
    %193 = vmatprep.subr.bf16.mxu0 0
    %194 = vmatpush1.bf16.msra.mxu0 0
    %195 = vmatprep.subr.bf16.mxu0 0
    %196 = vmatpush1.bf16.msra.mxu0 0
    %197 = vmatprep.subr.bf16.mxu0 0
    %198 = vmatpush1.bf16.msra.mxu0 0
    %199 = vmatprep.subr.bf16.mxu0 0
    %200 = vmatpush1.bf16.msra.mxu0 0
    %201 = vmatprep.subr.bf16.mxu0 0
    %202 = vmatpush1.bf16.msra.mxu0 0
    %203 = vmatprep.subr.bf16.mxu0 0
    %204 = vmatpush1.bf16.msra.mxu0 0
    %205 = vmatprep.mubr.bf16.mxu0 0
    %206 = vmatmul.mubr.bf16.gmra.mrb[0].mxu0 %v121
    %v207 = vpop.f32.mrb[0].mxu0
    %v208 = vadd.f32 0.0, %v207
    %v209 = vpop.f32.mrb[0].mxu0
    %v210 = vpop.f32.mrb[0].mxu0
    %v211 = vadd.f32 0.0, %v210
    %v212 = vpop.f32.mrb[0].mxu0
    %213 = vmatprep.mubr.bf16.mxu0 0
    %214 = vmatmul.mubr.bf16.gmra.mrb[0].mxu0 %v122
    %v215 = vpop.f32.mrb[0].mxu0
    %v216 = vadd.f32 0.0, %v215
    %v217 = vpop.f32.mrb[0].mxu0
    %v218 = vpop.f32.mrb[0].mxu0
    %v219 = vadd.f32 0.0, %v218
    %v220 = vpop.f32.mrb[0].mxu0
    %221 = vdwg.mxu0
    %v226 = vunpack.c.l.b16 %v27
    %v227 = vunpack.c.l.b16 %v28
    %v228 = vunpack.c.l.b16 %v30
    %v229 = vunpack.c.l.b16 %v31
    %v230 = vpack.c.b16 %v227, %v226
    %v231 = vpack.c.b16 %v229, %v228
    %v250 = vunpack.c.l.b16 %v33
    %v251 = vunpack.c.l.b16 %v34
    %v252 = vunpack.c.l.b16 %v35
    %v253 = vunpack.c.l.b16 %v36
    %v254 = vunpack.c.l.b16 %v37
    %v255 = vunpack.c.l.b16 %v38
    %v256 = vunpack.c.l.b16 %v39
    %v257 = vunpack.c.l.b16 %v40
    %v258 = vunpack.c.l.b16 %v41
    %v259 = vunpack.c.l.b16 %v42
    %v260 = vunpack.c.l.b16 %v43
    %v261 = vunpack.c.l.b16 %v44
    %v262 = vunpack.c.l.b16 %v45
    %v263 = vunpack.c.l.b16 %v46
    %v264 = vunpack.c.l.b16 %v47
    %v265 = vunpack.c.l.b16 %v48
    %v266 = vpack.c.b16 %v251, %v250
    %v267 = vpack.c.b16 %v253, %v252
    %v268 = vpack.c.b16 %v255, %v254
    %v269 = vpack.c.b16 %v257, %v256
    %v270 = vpack.c.b16 %v259, %v258
    %v271 = vpack.c.b16 %v261, %v260
    %v272 = vpack.c.b16 %v263, %v262
    %v273 = vpack.c.b16 %v265, %v264
    %282 = vmatprep.subr.bf16.mxu0 0
    %283 = vmatpush1.bf16.msra.mxu0 %v266
    %284 = vmatprep.subr.bf16.mxu0 0
    %285 = vmatpush1.bf16.msra.mxu0 %v267
    %286 = vmatprep.subr.bf16.mxu0 0
    %287 = vmatpush1.bf16.msra.mxu0 %v268
    %288 = vmatprep.subr.bf16.mxu0 0
    %289 = vmatpush1.bf16.msra.mxu0 %v269
    %290 = vmatprep.subr.bf16.mxu0 0
    %291 = vmatpush1.bf16.msra.mxu0 %v270
    %292 = vmatprep.subr.bf16.mxu0 0
    %293 = vmatpush1.bf16.msra.mxu0 %v271
    %294 = vmatprep.subr.bf16.mxu0 0
    %295 = vmatpush1.bf16.msra.mxu0 %v272
    %296 = vmatprep.subr.bf16.mxu0 0
    %297 = vmatpush1.bf16.msra.mxu0 %v273
    %298 = vmatprep.subr.bf16.mxu0 0
    %299 = vmatpush1.bf16.msra.mxu0 0
    %300 = vmatprep.subr.bf16.mxu0 0
    %301 = vmatpush1.bf16.msra.mxu0 0
    %302 = vmatprep.subr.bf16.mxu0 0
    %303 = vmatpush1.bf16.msra.mxu0 0
    %304 = vmatprep.subr.bf16.mxu0 0
    %305 = vmatpush1.bf16.msra.mxu0 0
    %306 = vmatprep.subr.bf16.mxu0 0
    %307 = vmatpush1.bf16.msra.mxu0 0
    %308 = vmatprep.subr.bf16.mxu0 0
    %309 = vmatpush1.bf16.msra.mxu0 0
    %310 = vmatprep.subr.bf16.mxu0 0
    %311 = vmatpush1.bf16.msra.mxu0 0
    %312 = vmatprep.subr.bf16.mxu0 0
    %313 = vmatpush1.bf16.msra.mxu0 0
    %314 = vmatprep.mubr.bf16.mxu0 0
    %315 = vmatmul.mubr.bf16.gmra.mrb[0].mxu0 %v230
    %v316 = vpop.f32.mrb[0].mxu0
    %v317 = vadd.f32 %v208, %v316
    %v318 = vpop.f32.mrb[0].mxu0
    %v319 = vpop.f32.mrb[0].mxu0
    %v320 = vadd.f32 %v211, %v319
    %v321 = vpop.f32.mrb[0].mxu0
    %322 = vmatprep.mubr.bf16.mxu0 0
    %323 = vmatmul.mubr.bf16.gmra.mrb[0].mxu0 %v231
    %v324 = vpop.f32.mrb[0].mxu0
    %v325 = vadd.f32 %v216, %v324
    %v326 = vpop.f32.mrb[0].mxu0
    %v327 = vpop.f32.mrb[0].mxu0
    %v328 = vadd.f32 %v219, %v327
    %v329 = vpop.f32.mrb[0].mxu0
    %330 = vdwg.mxu0
    %vm333 = vcmask 1042432
    %vm334 = vcmask 1046532
    %vm335 = vmor %vm333, %vm334
    %v336 = vrot.slane %v27, 5
    %v337 = vrot.slane %v336, 4
    %v338 = vrot.slane %v28, 5
    %v339 = vsel %vm335, %v337, %v338
    %v340 = vrot.slane %v338, 4
    %v341 = vrot.slane %v29, 5
    %v342 = vsel %vm335, %v340, %v341
    %v343 = vrot.slane %v30, 5
    %v344 = vrot.slane %v343, 4
    %v345 = vrot.slane %v31, 5
    %v346 = vsel %vm335, %v344, %v345
    %v347 = vrot.slane %v345, 4
    %v348 = vrot.slane %v32, 5
    %v349 = vsel %vm335, %v347, %v348
    %s350 = scalar_lea.vmem [#allocation2], 128
    %v351 = vld [vmem:[%s350] sm:$0xf]
    %v352 = vld [vmem:[%s350 + $0x4] sm:$0xf]
    %v353 = vld [vmem:[%s350 + $0x8] sm:$0xf]
    %v354 = vld [vmem:[%s350 + $0xc] sm:$0xf]
    %v355 = vld [vmem:[%s350 + $0x10] sm:$0xf]
    %v356 = vld [vmem:[%s350 + $0x14] sm:$0xf]
    %v357 = vld [vmem:[%s350 + $0x18] sm:$0xf]
    %v358 = vld [vmem:[%s350 + $0x1c] sm:$0xf]
    %v359 = vld [vmem:[%s350 + $0x20] sm:$0xf]
    %v360 = vld [vmem:[%s350 + $0x24] sm:$0xf]
    %v361 = vld [vmem:[%s350 + $0x28] sm:$0xf]
    %v362 = vld [vmem:[%s350 + $0x2c] sm:$0xf]
    %v363 = vld [vmem:[%s350 + $0x30] sm:$0xf]
    %v364 = vld [vmem:[%s350 + $0x34] sm:$0xf]
    %v365 = vld [vmem:[%s350 + $0x38] sm:$0xf]
    %v366 = vld [vmem:[%s350 + $0x3c] sm:$0xf]
    %v367 = vunpack.c.l.b16 %v339
    %v368 = vunpack.c.l.b16 %v342
    %v369 = vunpack.c.l.b16 %v346
    %v370 = vunpack.c.l.b16 %v349
    %v371 = vpack.c.b16 %v368, %v367
    %v372 = vpack.c.b16 %v370, %v369
    %v391 = vunpack.c.l.b16 %v351
    %v392 = vunpack.c.l.b16 %v352
    %v393 = vunpack.c.l.b16 %v353
    %v394 = vunpack.c.l.b16 %v354
    %v395 = vunpack.c.l.b16 %v355
    %v396 = vunpack.c.l.b16 %v356
    %v397 = vunpack.c.l.b16 %v357
    %v398 = vunpack.c.l.b16 %v358
    %v399 = vunpack.c.l.b16 %v359
    %v400 = vunpack.c.l.b16 %v360
    %v401 = vunpack.c.l.b16 %v361
    %v402 = vunpack.c.l.b16 %v362
    %v403 = vunpack.c.l.b16 %v363
    %v404 = vunpack.c.l.b16 %v364
    %v405 = vunpack.c.l.b16 %v365
    %v406 = vunpack.c.l.b16 %v366
    %v407 = vpack.c.b16 %v392, %v391
    %v408 = vpack.c.b16 %v394, %v393
    %v409 = vpack.c.b16 %v396, %v395
    %v410 = vpack.c.b16 %v398, %v397
    %v411 = vpack.c.b16 %v400, %v399
    %v412 = vpack.c.b16 %v402, %v401
    %v413 = vpack.c.b16 %v404, %v403
    %v414 = vpack.c.b16 %v406, %v405
    %423 = vmatprep.subr.bf16.mxu0 0
    %424 = vmatpush1.bf16.msra.mxu0 %v407
    %425 = vmatprep.subr.bf16.mxu0 0
    %426 = vmatpush1.bf16.msra.mxu0 %v408
    %427 = vmatprep.subr.bf16.mxu0 0
    %428 = vmatpush1.bf16.msra.mxu0 %v409
    %429 = vmatprep.subr.bf16.mxu0 0
    %430 = vmatpush1.bf16.msra.mxu0 %v410
    %431 = vmatprep.subr.bf16.mxu0 0
    %432 = vmatpush1.bf16.msra.mxu0 %v411
    %433 = vmatprep.subr.bf16.mxu0 0
    %434 = vmatpush1.bf16.msra.mxu0 %v412
    %435 = vmatprep.subr.bf16.mxu0 0
    %436 = vmatpush1.bf16.msra.mxu0 %v413
    %437 = vmatprep.subr.bf16.mxu0 0
    %438 = vmatpush1.bf16.msra.mxu0 %v414
    %439 = vmatprep.subr.bf16.mxu0 0
    %440 = vmatpush1.bf16.msra.mxu0 0
    %441 = vmatprep.subr.bf16.mxu0 0
    %442 = vmatpush1.bf16.msra.mxu0 0
    %443 = vmatprep.subr.bf16.mxu0 0
    %444 = vmatpush1.bf16.msra.mxu0 0
    %445 = vmatprep.subr.bf16.mxu0 0
    %446 = vmatpush1.bf16.msra.mxu0 0
    %447 = vmatprep.subr.bf16.mxu0 0
    %448 = vmatpush1.bf16.msra.mxu0 0
    %449 = vmatprep.subr.bf16.mxu0 0
    %450 = vmatpush1.bf16.msra.mxu0 0
    %451 = vmatprep.subr.bf16.mxu0 0
    %452 = vmatpush1.bf16.msra.mxu0 0
    %453 = vmatprep.subr.bf16.mxu0 0
    %454 = vmatpush1.bf16.msra.mxu0 0
    %455 = vmatprep.mubr.bf16.mxu0 0
    %456 = vmatmul.mubr.bf16.gmra.mrb[0].mxu0 %v371
    %v457 = vpop.f32.mrb[0].mxu0
    %v458 = vadd.f32 0.0, %v457
    %v459 = vpop.f32.mrb[0].mxu0
    %v460 = vpop.f32.mrb[0].mxu0
    %v461 = vadd.f32 0.0, %v460
    %v462 = vpop.f32.mrb[0].mxu0
    %463 = vmatprep.mubr.bf16.mxu0 0
    %464 = vmatmul.mubr.bf16.gmra.mrb[0].mxu0 %v372
    %v465 = vpop.f32.mrb[0].mxu0
    %v466 = vadd.f32 0.0, %v465
    %v467 = vpop.f32.mrb[0].mxu0
    %v468 = vpop.f32.mrb[0].mxu0
    %v469 = vadd.f32 0.0, %v468
    %v470 = vpop.f32.mrb[0].mxu0
    %471 = vdwg.mxu0
    %v472 = vadd.f32 %v317, %v458
    %v473 = vadd.f32 %v320, %v461
    %v474 = vadd.f32 %v325, %v466
    %v475 = vadd.f32 %v328, %v469
    %v476 = vadd.f32 %v472, %v473
    %v477 = vadd.f32 %v476, %v474
    %v478 = vadd.f32 %v477, %v475
    %v479 = vrot.slane %v478, 4
    %v480 = vadd.f32 %v478, %v479
    %v481 = vrot.slane %v480, 2
    %v482 = vadd.f32 %v480, %v481
    %v483 = vrot.slane %v482, 1
    %v484 = vadd.f32 %v482, %v483
    %485 = vst [vmem:[#allocation5] sm:$0x1] %v484
    %v486 = vmul.f32 %v472, %v472
    %v487 = vmul.f32 %v473, %v473
    %v488 = vmul.f32 %v474, %v474
    %v489 = vmul.f32 %v475, %v475
    %v490 = vadd.f32 %v486, %v487
    %v491 = vadd.f32 %v490, %v488
    %v492 = vadd.f32 %v491, %v489
    %v493 = vrot.slane %v492, 4
    %v494 = vadd.f32 %v492, %v493
    %v495 = vrot.slane %v494, 2
    %v496 = vadd.f32 %v494, %v495
    %v497 = vrot.slane %v496, 1
    %v498 = vadd.f32 %v496, %v497
    %499 = vst [vmem:[#allocation5 + $0x1] sm:$0x1] %v498
    // Predicated region
    $region14: #{tpu_custom_call.1} parent=1 // pred_check
      _
    $region15: #{tpu_custom_call.1} parent=1 // pred_check_branch
      %501 = sbr.rel (0) target = $region17
    $region16: #{tpu_custom_call.1} parent=1 // pred_region
      %s503 = ssub.s32 32, 32
      %504 = vsyncadd [#allocation4], %s503
      %s506 = sshll.u32 [#allocation5], 4
      %s507 = int_to_ptr.vmem [resolvable:$true] %s506
      %509 = dma.vmem_to_hbm [thread:$0]  %s507, 32, %s2, [#allocation4]
    $region17: #{tpu_custom_call.1} parent=1 // pred_fallthru
      _
    // Predicated region
    $region18: #{tpu_custom_call.1} parent=1 // pred_check
      _
    $region19: #{tpu_custom_call.1} parent=1 // pred_check_branch
      %511 = sbr.rel (0) target = $region21
    $region20: #{tpu_custom_call.1} parent=1 // pred_region
      %512 = dma.done [#allocation4], 32
    $region21: #{tpu_custom_call.1} parent=1 // pred_fallthru
      _
    %513 = vsyncpa [#allocation3], 1
    %514 = vsyncpa [#allocation4], 1

</llo_original>
